<compile_context>
chip_gen: v7x
topology: tpu7x:2x2x1
jax: 0.10.0
libtpu: 0.0.40
codegen_flags: <defaults>
</compile_context>

<pallas_src>
import numpy as np
import jax
import jax.numpy as jnp
from jax.experimental import pallas as pl
from jax.experimental.pallas import tpu as pltpu

N_QUBITS = 4
N_LAYERS = 2
DIM = 2 ** N_QUBITS          # 16
IN_FEATURES = 784
K_PAD = 896                  # 7 * 128, lane-aligned contraction dim
OUT_FEATURES = 2
OUT_PAD = 128                # lane-dense output slab width
TILE_B_MAX = 512             # safe on v5e/v6e/v7x VMEM with double buffering


def _round_up(x, m):
    return (x + m - 1) // m * m


# ----------------------------- Pallas kernel -----------------------------

def _quantum_nn_kernel(x_ref, w1_ref, b1_ref, ut_ref, zw_ref, b2_ref, o_ref):
    # x: (TILE_B, 896) f32  (K zero-padded 784->896)
    x = x_ref[...]

    # pre_processing: Linear(784 -> 16) + ReLU
    h = jnp.dot(x, w1_ref[...], preferred_element_type=jnp.float32) + b1_ref[...]
    h = jnp.maximum(h, 0.0)                                   # (TILE_B, 16)

    # QuantumLayer -- amplitude embedding (L2 normalize; eps guards zero rows)
    norm2 = jnp.sum(h * h, axis=-1, keepdims=True)
    psi = h * jax.lax.rsqrt(norm2 + 1e-12)                    # (TILE_B, 16)

    # circuit evolution: psi' = psi @ U^T  (U^T precomputed outside)
    psi2 = jnp.dot(psi, ut_ref[...], preferred_element_type=jnp.float32)

    # Pauli-Z expvals + post_processing Linear(4 -> 2), fused:
    # probs @ (Z @ W2) + b2, written into a lane-dense (TILE_B, 128) slab.
    probs = psi2 * psi2                                        # (TILE_B, 16)
    out = jnp.dot(probs, zw_ref[...], preferred_element_type=jnp.float32) + b2_ref[...]
    o_ref[...] = out


def quantum_nn_forward(x, w1, b1, u_t, z_signs, w2, b2):
    B = x.shape[0]
    x_flat = x.reshape(B, -1).astype(jnp.float32)              # x.view(B, -1)

    # Batch tile sizing (generation-safe: <= 512 rows keeps double-buffered
    # x tiles ~3.6 MiB, far under every gen's scoped VMEM).
    tile_b = min(TILE_B_MAX, _round_up(B, 8))
    b_pad = _round_up(B, tile_b)
    n_tiles = b_pad // tile_b

    # Pad batch and contraction dims (zeros don't change the matmul result;
    # padded rows are sliced off at the end).
    x_p = jnp.zeros((b_pad, K_PAD), jnp.float32).at[:B, :IN_FEATURES].set(x_flat)
    w1_p = jnp.zeros((K_PAD, DIM), jnp.float32).at[:IN_FEATURES, :].set(
        w1.astype(jnp.float32))
    b1r = b1.reshape(1, DIM).astype(jnp.float32)

    # Fold z_signs @ w2 into one (16, OUT_PAD) matrix; pad bias to OUT_PAD.
    zw = jnp.zeros((DIM, OUT_PAD), jnp.float32).at[:, :OUT_FEATURES].set(
        z_signs.astype(jnp.float32) @ w2.astype(jnp.float32))
    b2r = jnp.zeros((1, OUT_PAD), jnp.float32).at[0, :OUT_FEATURES].set(
        b2.astype(jnp.float32))

    cost = pl.CostEstimate(
        flops=2 * b_pad * (K_PAD * DIM + DIM * DIM + DIM * OUT_PAD),
        transcendentals=b_pad,
        bytes_accessed=(b_pad * K_PAD + K_PAD * DIM + DIM * DIM
                        + DIM * OUT_PAD + OUT_PAD + DIM
                        + b_pad * OUT_PAD) * 4,
    )

    const = lambda shape: pl.BlockSpec(shape, lambda i: (0, 0))

    out_pad = pl.pallas_call(
        _quantum_nn_kernel,
        grid=(n_tiles,),
        in_specs=[
            pl.BlockSpec((tile_b, K_PAD), lambda i: (i, 0)),   # x, batch-tiled
            const((K_PAD, DIM)),                               # w1 (resident)
            const((1, DIM)),                                   # b1
            const((DIM, DIM)),                                 # U^T
            const((DIM, OUT_PAD)),                             # Z @ W2
            const((1, OUT_PAD)),                               # b2
        ],
        out_specs=pl.BlockSpec((tile_b, OUT_PAD), lambda i: (i, 0)),
        out_shape=jax.ShapeDtypeStruct((b_pad, OUT_PAD), jnp.float32),
        compiler_params=pltpu.CompilerParams(
            dimension_semantics=("parallel",)),
        cost_estimate=cost,
    )(x_p, w1_p, b1r, u_t, zw, b2r)

    return out_pad[:B, :OUT_FEATURES]


# --------------------- circuit construction (plain-JAX glue) ---------------------

def _ry_matrix(theta):
    c = np.cos(theta / 2.0)
    s = np.sin(theta / 2.0)
    return np.array([[c, -s], [s, c]], dtype=np.float32)


def _cnot_matrix(n, control, target):
    dim = 2 ** n
    idx = np.arange(dim)
    cbit = (idx >> (n - 1 - control)) & 1
    new_idx = np.where(cbit == 1, idx ^ (1 << (n - 1 - target)), idx)
    m = np.zeros((dim, dim), dtype=np.float32)
    m[new_idx, idx] = 1.0        # |new><old|
    return m


def build_circuit(theta):
    """theta: (N_LAYERS, N_QUBITS) rotation angles -> (U^T, Z-sign matrix)."""
    theta = np.asarray(theta, dtype=np.float32)
    u = np.eye(DIM, dtype=np.float32)
    for layer in range(N_LAYERS):
        rot = np.array([[1.0]], dtype=np.float32)
        for q in range(N_QUBITS):           # qubit 0 = most-significant bit
            rot = np.kron(rot, _ry_matrix(theta[layer, q]))
        layer_u = rot
        for q in range(N_QUBITS):           # entangling CNOT ring
            layer_u = _cnot_matrix(N_QUBITS, q, (q + 1) % N_QUBITS) @ layer_u
        u = layer_u @ u

    idx = np.arange(DIM)
    z = np.stack(
        [1.0 - 2.0 * ((idx >> (N_QUBITS - 1 - q)) & 1) for q in range(N_QUBITS)],
        axis=-1,
    ).astype(np.float32)                                       # (16, 4)
    return jnp.asarray(u.T), jnp.asarray(z)


def init_params(key):
    k1, k2, k3, k4, k5 = jax.random.split(key, 5)
    lim1 = 1.0 / np.sqrt(IN_FEATURES)
    lim2 = 1.0 / np.sqrt(N_QUBITS)
    return {
        "w1": jax.random.uniform(k1, (IN_FEATURES, DIM), jnp.float32, -lim1, lim1),
        "b1": jax.random.uniform(k2, (DIM,), jnp.float32, -lim1, lim1),
        "theta": jax.random.uniform(k3, (N_LAYERS, N_QUBITS), jnp.float32, 0.0, 2.0 * np.pi),
        "w2": jax.random.uniform(k4, (N_QUBITS, OUT_FEATURES), jnp.float32, -lim2, lim2),
        "b2": jax.random.uniform(k5, (OUT_FEATURES,), jnp.float32, -lim2, lim2),
    }


def _reference_forward(x, w1, b1, u_t, z_signs, w2, b2):
    B = x.shape[0]
    h = jnp.maximum(x.reshape(B, -1).astype(jnp.float32) @ w1 + b1, 0.0)
    psi = h * jax.lax.rsqrt(jnp.sum(h * h, axis=-1, keepdims=True) + 1e-12)
    psi2 = psi @ u_t
    ev = (psi2 * psi2) @ z_signs
    return ev @ w2 + b2


# ----------------------------------- main -----------------------------------

if __name__ == "__main__":
    key = jax.random.PRNGKey(0)
    kx, kp = jax.random.split(key)

    # MNIST-shaped input (NCHW), batch=2
    x = jax.random.uniform(kx, (2, 1, 28, 28), jnp.float32)

    params = init_params(kp)
    u_t, z_signs = build_circuit(np.asarray(params["theta"]))

    out = quantum_nn_forward(
        x, params["w1"], params["b1"], u_t, z_signs, params["w2"], params["b2"]
    )
    out = jax.block_until_ready(out)

    ref = _reference_forward(
        x, params["w1"], params["b1"], u_t, z_signs, params["w2"], params["b2"]
    )

    assert out.shape == (2, OUT_FEATURES) and out.dtype == jnp.float32
    np.testing.assert_allclose(np.asarray(out), np.asarray(ref), rtol=1e-5, atol=1e-5)
    print("KERNEL_OK")
</pallas_src>

<mosaic_0001>
module attributes {stable_mosaic.version = 11 : i64} {
  func.func @_quantum_nn_kernel(%arg0: i32, %arg1: memref<8x896xf32, #tpu.memory_space<vmem>>, %arg2: memref<896x16xf32, #tpu.memory_space<vmem>>, %arg3: memref<1x16xf32, #tpu.memory_space<vmem>>, %arg4: memref<16x16xf32, #tpu.memory_space<vmem>>, %arg5: memref<16x128xf32, #tpu.memory_space<vmem>>, %arg6: memref<1x128xf32, #tpu.memory_space<vmem>>, %arg7: memref<8x128xf32, #tpu.memory_space<vmem>>) attributes {dimension_semantics = [#tpu.dimension_semantics<parallel>], iteration_bounds = array<i64: 1>, scalar_prefetch = 0 : i64, scratch_operands = 0 : i64, tpu.core_type = #tpu.core_type<tc>, window_params = [{transform_indices = @transform_0, window_bounds = array<i64: 8, 896>}, {pipeline_mode = #tpu.pipeline_mode<synchronous>, transform_indices = @transform_1, window_bounds = array<i64: 896, 16>}, {pipeline_mode = #tpu.pipeline_mode<synchronous>, transform_indices = @transform_2, window_bounds = array<i64: 1, 16>}, {pipeline_mode = #tpu.pipeline_mode<synchronous>, transform_indices = @transform_3, window_bounds = array<i64: 16, 16>}, {pipeline_mode = #tpu.pipeline_mode<synchronous>, transform_indices = @transform_4, window_bounds = array<i64: 16, 128>}, {pipeline_mode = #tpu.pipeline_mode<synchronous>, transform_indices = @transform_5, window_bounds = array<i64: 1, 128>}, {transform_indices = @transform_6, window_bounds = array<i64: 8, 128>}]} {
    %c0 = arith.constant 0 : index
    %c0_0 = arith.constant 0 : index
    %0 = vector.load %arg1[%c0, %c0_0] : memref<8x896xf32, #tpu.memory_space<vmem>>, vector<8x896xf32>
    %c0_1 = arith.constant 0 : index
    %c0_2 = arith.constant 0 : index
    %1 = vector.load %arg2[%c0_1, %c0_2] : memref<896x16xf32, #tpu.memory_space<vmem>>, vector<896x16xf32>
    %cst = arith.constant dense<0.000000e+00> : vector<8x16xf32>
    %2 = tpu.matmul %0, %1, %cst {dimension_numbers = #tpu.dot_dimension_numbers<[1], [0], [0], [1], [0, 0, 1, 1], [], []>} : vector<8x896xf32>, vector<896x16xf32>, vector<8x16xf32> -> vector<8x16xf32>
    %c0_3 = arith.constant 0 : index
    %c0_4 = arith.constant 0 : index
    %3 = vector.load %arg3[%c0_3, %c0_4] : memref<1x16xf32, #tpu.memory_space<vmem>>, vector<1x16xf32>
    %4 = vector.broadcast %3 : vector<1x16xf32> to vector<8x16xf32>
    %5 = arith.addf %2, %4 : vector<8x16xf32>
    %cst_5 = arith.constant 0.000000e+00 : f32
    %6 = vector.broadcast %cst_5 : f32 to vector<8x16xf32>
    %7 = arith.maximumf %5, %6 : vector<8x16xf32>
    %8 = arith.mulf %7, %7 : vector<8x16xf32>
    %cst_6 = arith.constant dense<0.000000e+00> : vector<8xf32>
    %9 = vector.multi_reduction <add>, %8, %cst_6 [1] : vector<8x16xf32> to vector<8xf32>
    %10 = vector.shape_cast %9 : vector<8xf32> to vector<8x1xf32>
    %cst_7 = arith.constant 9.99999996E-13 : f32
    %11 = vector.broadcast %cst_7 : f32 to vector<8x1xf32>
    %12 = arith.addf %10, %11 : vector<8x1xf32>
    %13 = math.rsqrt %12 : vector<8x1xf32>
    %14 = vector.broadcast %13 : vector<8x1xf32> to vector<8x16xf32>
    %15 = arith.mulf %7, %14 : vector<8x16xf32>
    %c0_8 = arith.constant 0 : index
    %c0_9 = arith.constant 0 : index
    %16 = vector.load %arg4[%c0_8, %c0_9] : memref<16x16xf32, #tpu.memory_space<vmem>>, vector<16x16xf32>
    %cst_10 = arith.constant dense<0.000000e+00> : vector<8x16xf32>
    %17 = tpu.matmul %15, %16, %cst_10 {dimension_numbers = #tpu.dot_dimension_numbers<[1], [0], [0], [1], [0, 0, 1, 1], [], []>} : vector<8x16xf32>, vector<16x16xf32>, vector<8x16xf32> -> vector<8x16xf32>
    %18 = arith.mulf %17, %17 : vector<8x16xf32>
    %c0_11 = arith.constant 0 : index
    %c0_12 = arith.constant 0 : index
    %19 = vector.load %arg5[%c0_11, %c0_12] : memref<16x128xf32, #tpu.memory_space<vmem>>, vector<16x128xf32>
    %cst_13 = arith.constant dense<0.000000e+00> : vector<8x128xf32>
    %20 = tpu.matmul %18, %19, %cst_13 {dimension_numbers = #tpu.dot_dimension_numbers<[1], [0], [0], [1], [0, 0, 1, 1], [], []>} : vector<8x16xf32>, vector<16x128xf32>, vector<8x128xf32> -> vector<8x128xf32>
    %c0_14 = arith.constant 0 : index
    %c0_15 = arith.constant 0 : index
    %21 = vector.load %arg6[%c0_14, %c0_15] : memref<1x128xf32, #tpu.memory_space<vmem>>, vector<1x128xf32>
    %22 = vector.broadcast %21 : vector<1x128xf32> to vector<8x128xf32>
    %23 = arith.addf %20, %22 : vector<8x128xf32>
    %c0_16 = arith.constant 0 : index
    %c0_17 = arith.constant 0 : index
    %24 = vector.load %arg7[%c0_16, %c0_17] : memref<8x128xf32, #tpu.memory_space<vmem>>, vector<8x128xf32>
    tpu.vector_store %arg7[%c0_16, %c0_17], %23 {strides = array<i32>} : memref<8x128xf32, #tpu.memory_space<vmem>>, vector<8x128xf32>,
    return
  }
  func.func @transform_0(%arg0: i32) -> (i32, i32) {
    %c0_i32 = arith.constant 0 : i32
    %c0_i32_0 = arith.constant 0 : i32
    return %arg0, %c0_i32 : i32, i32
  }
  func.func @transform_1(%arg0: i32) -> (i32, i32) {
    %c0_i32 = arith.constant 0 : i32
    %c0_i32_0 = arith.constant 0 : i32
    %c0_i32_1 = arith.constant 0 : i32
    return %c0_i32, %c0_i32_0 : i32, i32
  }
  func.func @transform_2(%arg0: i32) -> (i32, i32) {
    %c0_i32 = arith.constant 0 : i32
    %c0_i32_0 = arith.constant 0 : i32
    %c0_i32_1 = arith.constant 0 : i32
    return %c0_i32, %c0_i32_0 : i32, i32
  }
  func.func @transform_3(%arg0: i32) -> (i32, i32) {
    %c0_i32 = arith.constant 0 : i32
    %c0_i32_0 = arith.constant 0 : i32
    %c0_i32_1 = arith.constant 0 : i32
    return %c0_i32, %c0_i32_0 : i32, i32
  }
  func.func @transform_4(%arg0: i32) -> (i32, i32) {
    %c0_i32 = arith.constant 0 : i32
    %c0_i32_0 = arith.constant 0 : i32
    %c0_i32_1 = arith.constant 0 : i32
    return %c0_i32, %c0_i32_0 : i32, i32
  }
  func.func @transform_5(%arg0: i32) -> (i32, i32) {
    %c0_i32 = arith.constant 0 : i32
    %c0_i32_0 = arith.constant 0 : i32
    %c0_i32_1 = arith.constant 0 : i32
    return %c0_i32, %c0_i32_0 : i32, i32
  }
  func.func @transform_6(%arg0: i32) -> (i32, i32) {
    %c0_i32 = arith.constant 0 : i32
    %c0_i32_0 = arith.constant 0 : i32
    return %arg0, %c0_i32 : i32, i32
  }
}

</mosaic_0001>

<llo_original>
// kernel: tpu_custom_call.1
$region0: #{tpu_custom_call.1}
  #allocation0 [shape = 'u32[]', space=smem, size = 0x4, offset = 0x4, fixed_abs, tag = 'smem constant byte address 0x4 - core index']
  #allocation1 [shape = 'u32[144,128]{1,0:T(1,128)}', space=vmem, size = 0x12000, scoped, tag = 'internal scratch']
  %s0 = inlined_call_operand.vmem [shape: f32[8,896], index: 0, kind: input, shape index: {}]
  %s1 = inlined_call_operand.vmem [shape: f32[896,16], index: 1, kind: input, shape index: {}]
  %s2 = inlined_call_operand.vmem [shape: f32[1,16], index: 2, kind: input, shape index: {}]
  %s3 = inlined_call_operand.vmem [shape: f32[16,16], index: 3, kind: input, shape index: {}]
  %s4 = inlined_call_operand.vmem [shape: f32[16,128], index: 4, kind: input, shape index: {}]
  %s5 = inlined_call_operand.vmem [shape: f32[1,128], index: 5, kind: input, shape index: {}]
  %s6 = inlined_call_operand.hbm [shape: f32[8,128], index: 6, kind: output, shape index: {}]
  %s7 = sld [smem:[#allocation0]]
  $region34: #{tpu_custom_call.1} parent=0
    _
  %s9 = ssub.s32 1, %s7
  %s10 = scalar_select 0, %s9, %s7
  $region1: #{tpu_custom_call.1} parent=0
    #allocation2 [shape = 'u8[4096]{0}', space=vmem, size = 0x1000, scoped, tag = 'output window, operand 0, single buffered']
    #allocation3 [shape = 's32[1]{0}', space=sflag, size = 0x4, scoped, tag = 'scoped memory for tpu_custom_call.1']
    %11 = vsyncpa [#allocation3], 0
    // Predicated region
    $region2: #{tpu_custom_call.1} parent=1 // pred_check
      _
    $region3: #{tpu_custom_call.1} parent=1 // pred_check_branch
      %13 = sbr.rel (0) target = $region5
    $region4: #{tpu_custom_call.1} parent=1 // pred_region
      _
    $region5: #{tpu_custom_call.1} parent=1 // pred_fallthru
      _
    // Predicated region
    $region6: #{tpu_custom_call.1} parent=1 // pred_check
      _
    $region7: #{tpu_custom_call.1} parent=1 // pred_check_branch
      %15 = sbr.rel (0) target = $region9
    $region8: #{tpu_custom_call.1} parent=1 // pred_region
      _
    $region9: #{tpu_custom_call.1} parent=1 // pred_fallthru
      _
    // Predicated region
    $region10: #{tpu_custom_call.1} parent=1 // pred_check
      _
    $region11: #{tpu_custom_call.1} parent=1 // pred_check_branch
      %17 = sbr.rel (0) target = $region13
    $region12: #{tpu_custom_call.1} parent=1 // pred_region
      _
    $region13: #{tpu_custom_call.1} parent=1 // pred_fallthru
      _
    // Predicated region
    $region14: #{tpu_custom_call.1} parent=1 // pred_check
      _
    $region15: #{tpu_custom_call.1} parent=1 // pred_check_branch
      %19 = sbr.rel (0) target = $region17
    $region16: #{tpu_custom_call.1} parent=1 // pred_region
      _
    $region17: #{tpu_custom_call.1} parent=1 // pred_fallthru
      _
    // Predicated region
    $region18: #{tpu_custom_call.1} parent=1 // pred_check
      _
    $region19: #{tpu_custom_call.1} parent=1 // pred_check_branch
      %21 = sbr.rel (0) target = $region21
    $region20: #{tpu_custom_call.1} parent=1 // pred_region
      _
    $region21: #{tpu_custom_call.1} parent=1 // pred_fallthru
      _
    // Predicated region
    $region22: #{tpu_custom_call.1} parent=1 // pred_check
      _
    $region23: #{tpu_custom_call.1} parent=1 // pred_check_branch
      %23 = sbr.rel (0) target = $region25
    $region24: #{tpu_custom_call.1} parent=1 // pred_region
      _
    $region25: #{tpu_custom_call.1} parent=1 // pred_fallthru
      _
    %v24 = vld [vmem:[%s0] sm:$0xff]
    %v25 = vld [vmem:[%s0 + $0x8] sm:$0xff]
    %v26 = vld [vmem:[%s0 + $0x10] sm:$0xff]
    %v27 = vld [vmem:[%s0 + $0x18] sm:$0xff]
    %v28 = vld [vmem:[%s0 + $0x20] sm:$0xff]
    %v29 = vld [vmem:[%s0 + $0x28] sm:$0xff]
    %v30 = vld [vmem:[%s0 + $0x30] sm:$0xff]
    %v31 = vld [vmem:[%s1] sm:$0xff]
    %v32 = vld [vmem:[%s1 + $0x8] sm:$0xff]
    %v33 = vld [vmem:[%s1 + $0x10] sm:$0xff]
    %v34 = vld [vmem:[%s1 + $0x18] sm:$0xff]
    %v35 = vld [vmem:[%s1 + $0x20] sm:$0xff]
    %v36 = vld [vmem:[%s1 + $0x28] sm:$0xff]
    %v37 = vld [vmem:[%s1 + $0x30] sm:$0xff]
    %v38 = vld [vmem:[%s1 + $0x38] sm:$0xff]
    %v39 = vld [vmem:[%s1 + $0x40] sm:$0xff]
    %v40 = vld [vmem:[%s1 + $0x48] sm:$0xff]
    %v41 = vld [vmem:[%s1 + $0x50] sm:$0xff]
    %v42 = vld [vmem:[%s1 + $0x58] sm:$0xff]
    %v43 = vld [vmem:[%s1 + $0x60] sm:$0xff]
    %v44 = vld [vmem:[%s1 + $0x68] sm:$0xff]
    %v45 = vld [vmem:[%s1 + $0x70] sm:$0xff]
    %v46 = vld [vmem:[%s1 + $0x78] sm:$0xff]
    %v47 = vld [vmem:[%s1 + $0x80] sm:$0xff]
    %v48 = vld [vmem:[%s1 + $0x88] sm:$0xff]
    %v49 = vld [vmem:[%s1 + $0x90] sm:$0xff]
    %v50 = vld [vmem:[%s1 + $0x98] sm:$0xff]
    %v51 = vld [vmem:[%s1 + $0xa0] sm:$0xff]
    %v52 = vld [vmem:[%s1 + $0xa8] sm:$0xff]
    %v53 = vld [vmem:[%s1 + $0xb0] sm:$0xff]
    %v54 = vld [vmem:[%s1 + $0xb8] sm:$0xff]
    %v55 = vld [vmem:[%s1 + $0xc0] sm:$0xff]
    %v56 = vld [vmem:[%s1 + $0xc8] sm:$0xff]
    %v57 = vld [vmem:[%s1 + $0xd0] sm:$0xff]
    %v58 = vld [vmem:[%s1 + $0xd8] sm:$0xff]
    %v59 = vld [vmem:[%s1 + $0xe0] sm:$0xff]
    %v60 = vld [vmem:[%s1 + $0xe8] sm:$0xff]
    %v61 = vld [vmem:[%s1 + $0xf0] sm:$0xff]
    %v62 = vld [vmem:[%s1 + $0xf8] sm:$0xff]
    %v63 = vld [vmem:[%s1 + $0x100] sm:$0xff]
    %v64 = vld [vmem:[%s1 + $0x108] sm:$0xff]
    %v65 = vld [vmem:[%s1 + $0x110] sm:$0xff]
    %v66 = vld [vmem:[%s1 + $0x118] sm:$0xff]
    %v67 = vld [vmem:[%s1 + $0x120] sm:$0xff]
    %v68 = vld [vmem:[%s1 + $0x128] sm:$0xff]
    %v69 = vld [vmem:[%s1 + $0x130] sm:$0xff]
    %v70 = vld [vmem:[%s1 + $0x138] sm:$0xff]
    %v71 = vld [vmem:[%s1 + $0x140] sm:$0xff]
    %v72 = vld [vmem:[%s1 + $0x148] sm:$0xff]
    %v73 = vld [vmem:[%s1 + $0x150] sm:$0xff]
    %v74 = vld [vmem:[%s1 + $0x158] sm:$0xff]
    %v75 = vld [vmem:[%s1 + $0x160] sm:$0xff]
    %v76 = vld [vmem:[%s1 + $0x168] sm:$0xff]
    %v77 = vld [vmem:[%s1 + $0x170] sm:$0xff]
    %v78 = vld [vmem:[%s1 + $0x178] sm:$0xff]
    %v79 = vld [vmem:[%s1 + $0x180] sm:$0xff]
    %v80 = vld [vmem:[%s1 + $0x188] sm:$0xff]
    %v81 = vld [vmem:[%s1 + $0x190] sm:$0xff]
    %v82 = vld [vmem:[%s1 + $0x198] sm:$0xff]
    %v83 = vld [vmem:[%s1 + $0x1a0] sm:$0xff]
    %v84 = vld [vmem:[%s1 + $0x1a8] sm:$0xff]
    %v85 = vld [vmem:[%s1 + $0x1b0] sm:$0xff]
    %v86 = vld [vmem:[%s1 + $0x1b8] sm:$0xff]
    %v87 = vld [vmem:[%s1 + $0x1c0] sm:$0xff]
    %v88 = vld [vmem:[%s1 + $0x1c8] sm:$0xff]
    %v89 = vld [vmem:[%s1 + $0x1d0] sm:$0xff]
    %v90 = vld [vmem:[%s1 + $0x1d8] sm:$0xff]
    %v91 = vld [vmem:[%s1 + $0x1e0] sm:$0xff]
    %v92 = vld [vmem:[%s1 + $0x1e8] sm:$0xff]
    %v93 = vld [vmem:[%s1 + $0x1f0] sm:$0xff]
    %v94 = vld [vmem:[%s1 + $0x1f8] sm:$0xff]
    %v95 = vld [vmem:[%s1 + $0x200] sm:$0xff]
    %v96 = vld [vmem:[%s1 + $0x208] sm:$0xff]
    %v97 = vld [vmem:[%s1 + $0x210] sm:$0xff]
    %v98 = vld [vmem:[%s1 + $0x218] sm:$0xff]
    %v99 = vld [vmem:[%s1 + $0x220] sm:$0xff]
    %v100 = vld [vmem:[%s1 + $0x228] sm:$0xff]
    %v101 = vld [vmem:[%s1 + $0x230] sm:$0xff]
    %v102 = vld [vmem:[%s1 + $0x238] sm:$0xff]
    %v103 = vld [vmem:[%s1 + $0x240] sm:$0xff]
    %v104 = vld [vmem:[%s1 + $0x248] sm:$0xff]
    %v105 = vld [vmem:[%s1 + $0x250] sm:$0xff]
    %v106 = vld [vmem:[%s1 + $0x258] sm:$0xff]
    %v107 = vld [vmem:[%s1 + $0x260] sm:$0xff]
    %v108 = vld [vmem:[%s1 + $0x268] sm:$0xff]
    %v109 = vld [vmem:[%s1 + $0x270] sm:$0xff]
    %v110 = vld [vmem:[%s1 + $0x278] sm:$0xff]
    %v111 = vld [vmem:[%s1 + $0x280] sm:$0xff]
    %v112 = vld [vmem:[%s1 + $0x288] sm:$0xff]
    %v113 = vld [vmem:[%s1 + $0x290] sm:$0xff]
    %v114 = vld [vmem:[%s1 + $0x298] sm:$0xff]
    %v115 = vld [vmem:[%s1 + $0x2a0] sm:$0xff]
    %v116 = vld [vmem:[%s1 + $0x2a8] sm:$0xff]
    %v117 = vld [vmem:[%s1 + $0x2b0] sm:$0xff]
    %v118 = vld [vmem:[%s1 + $0x2b8] sm:$0xff]
    %v119 = vld [vmem:[%s1 + $0x2c0] sm:$0xff]
    %v120 = vld [vmem:[%s1 + $0x2c8] sm:$0xff]
    %v121 = vld [vmem:[%s1 + $0x2d0] sm:$0xff]
    %v122 = vld [vmem:[%s1 + $0x2d8] sm:$0xff]
    %v123 = vld [vmem:[%s1 + $0x2e0] sm:$0xff]
    %v124 = vld [vmem:[%s1 + $0x2e8] sm:$0xff]
    %v125 = vld [vmem:[%s1 + $0x2f0] sm:$0xff]
    %v126 = vld [vmem:[%s1 + $0x2f8] sm:$0xff]
    %v127 = vld [vmem:[%s1 + $0x300] sm:$0xff]
    %v128 = vld [vmem:[%s1 + $0x308] sm:$0xff]
    %v129 = vld [vmem:[%s1 + $0x310] sm:$0xff]
    %v130 = vld [vmem:[%s1 + $0x318] sm:$0xff]
    %v131 = vld [vmem:[%s1 + $0x320] sm:$0xff]
    %v132 = vld [vmem:[%s1 + $0x328] sm:$0xff]
    %v133 = vld [vmem:[%s1 + $0x330] sm:$0xff]
    %v134 = vld [vmem:[%s1 + $0x338] sm:$0xff]
    %v135 = vld [vmem:[%s1 + $0x340] sm:$0xff]
    %v136 = vld [vmem:[%s1 + $0x348] sm:$0xff]
    %v137 = vld [vmem:[%s1 + $0x350] sm:$0xff]
    %v138 = vld [vmem:[%s1 + $0x358] sm:$0xff]
    %v139 = vld [vmem:[%s1 + $0x360] sm:$0xff]
    %v140 = vld [vmem:[%s1 + $0x368] sm:$0xff]
    %v141 = vld [vmem:[%s1 + $0x370] sm:$0xff]
    %v142 = vld [vmem:[%s1 + $0x378] sm:$0xff]
    %v143 = vld [vmem:[%s2] sm:$0x1]
    %v145 = vlaneseq
    %v146 = vshrl.u32 %v145, 7
    %v147 = vsub.s32 0, %v146
    %v148 = vrot.slane %v143, %v147
    %150 = vmatprep.subr.mxu0 0.0
    %151 = vmatpush1.msra.mxu0 %v31
    %152 = vmatprep.subr.mxu0 0.0
    %153 = vmatpush1.msra.mxu0 %v32
    %154 = vmatprep.subr.mxu0 0.0
    %155 = vmatpush1.msra.mxu0 %v33
    %156 = vmatprep.subr.mxu0 0.0
    %157 = vmatpush1.msra.mxu0 %v34
    %158 = vmatprep.subr.mxu0 0.0
    %159 = vmatpush1.msra.mxu0 %v35
    %160 = vmatprep.subr.mxu0 0.0
    %161 = vmatpush1.msra.mxu0 %v36
    %162 = vmatprep.subr.mxu0 0.0
    %163 = vmatpush1.msra.mxu0 %v37
    %164 = vmatprep.subr.mxu0 0.0
    %165 = vmatpush1.msra.mxu0 %v38
    %166 = vmatprep.subr.mxu0 0.0
    %167 = vmatpush1.msra.mxu0 %v39
    %168 = vmatprep.subr.mxu0 0.0
    %169 = vmatpush1.msra.mxu0 %v40
    %170 = vmatprep.subr.mxu0 0.0
    %171 = vmatpush1.msra.mxu0 %v41
    %172 = vmatprep.subr.mxu0 0.0
    %173 = vmatpush1.msra.mxu0 %v42
    %174 = vmatprep.subr.mxu0 0.0
    %175 = vmatpush1.msra.mxu0 %v43
    %176 = vmatprep.subr.mxu0 0.0
    %177 = vmatpush1.msra.mxu0 %v44
    %178 = vmatprep.subr.mxu0 0.0
    %179 = vmatpush1.msra.mxu0 %v45
    %180 = vmatprep.subr.mxu0 0.0
    %181 = vmatpush1.msra.mxu0 %v46
    %182 = vmatprep.subr.mxu0 0.0
    %183 = vmatpush1.msra.mxu0 %v47
    %184 = vmatprep.subr.mxu0 0.0
    %185 = vmatpush1.msra.mxu0 %v48
    %186 = vmatprep.subr.mxu0 0.0
    %187 = vmatpush1.msra.mxu0 %v49
    %188 = vmatprep.subr.mxu0 0.0
    %189 = vmatpush1.msra.mxu0 %v50
    %190 = vmatprep.subr.mxu0 0.0
    %191 = vmatpush1.msra.mxu0 %v51
    %192 = vmatprep.subr.mxu0 0.0
    %193 = vmatpush1.msra.mxu0 %v52
    %194 = vmatprep.subr.mxu0 0.0
    %195 = vmatpush1.msra.mxu0 %v53
    %196 = vmatprep.subr.mxu0 0.0
    %197 = vmatpush1.msra.mxu0 %v54
    %198 = vmatprep.subr.mxu0 0.0
    %199 = vmatpush1.msra.mxu0 %v55
    %200 = vmatprep.subr.mxu0 0.0
    %201 = vmatpush1.msra.mxu0 %v56
    %202 = vmatprep.subr.mxu0 0.0
    %203 = vmatpush1.msra.mxu0 %v57
    %204 = vmatprep.subr.mxu0 0.0
    %205 = vmatpush1.msra.mxu0 %v58
    %206 = vmatprep.subr.mxu0 0.0
    %207 = vmatpush1.msra.mxu0 %v59
    %208 = vmatprep.subr.mxu0 0.0
    %209 = vmatpush1.msra.mxu0 %v60
    %210 = vmatprep.subr.mxu0 0.0
    %211 = vmatpush1.msra.mxu0 %v61
    %212 = vmatprep.subr.mxu0 0.0
    %213 = vmatpush1.msra.mxu0 %v62
    %214 = vmatprep.mubr.f32.mxu0 %v25
    %215 = vmatmul.mubr.f32.gmra.mrb[0].mxu0 %v24
    %v216 = vpop.f32.mrb[0].mxu0
    %v217 = vadd.f32 %v148, %v216
    %v218 = vpop.f32.mrb[0].mxu0
    %219 = vdwg.mxu0
    %220 = vmatprep.subr.mxu0 0.0
    %221 = vmatpush1.msra.mxu0 %v63
    %222 = vmatprep.subr.mxu0 0.0
    %223 = vmatpush1.msra.mxu0 %v64
    %224 = vmatprep.subr.mxu0 0.0
    %225 = vmatpush1.msra.mxu0 %v65
    %226 = vmatprep.subr.mxu0 0.0
    %227 = vmatpush1.msra.mxu0 %v66
    %228 = vmatprep.subr.mxu0 0.0
    %229 = vmatpush1.msra.mxu0 %v67
    %230 = vmatprep.subr.mxu0 0.0
    %231 = vmatpush1.msra.mxu0 %v68
    %232 = vmatprep.subr.mxu0 0.0
    %233 = vmatpush1.msra.mxu0 %v69
    %234 = vmatprep.subr.mxu0 0.0
    %235 = vmatpush1.msra.mxu0 %v70
    %236 = vmatprep.subr.mxu0 0.0
    %237 = vmatpush1.msra.mxu0 %v71
    %238 = vmatprep.subr.mxu0 0.0
    %239 = vmatpush1.msra.mxu0 %v72
    %240 = vmatprep.subr.mxu0 0.0
    %241 = vmatpush1.msra.mxu0 %v73
    %242 = vmatprep.subr.mxu0 0.0
    %243 = vmatpush1.msra.mxu0 %v74
    %244 = vmatprep.subr.mxu0 0.0
    %245 = vmatpush1.msra.mxu0 %v75
    %246 = vmatprep.subr.mxu0 0.0
    %247 = vmatpush1.msra.mxu0 %v76
    %248 = vmatprep.subr.mxu0 0.0
    %249 = vmatpush1.msra.mxu0 %v77
    %250 = vmatprep.subr.mxu0 0.0
    %251 = vmatpush1.msra.mxu0 %v78
    %252 = vmatprep.subr.mxu0 0.0
    %253 = vmatpush1.msra.mxu0 %v79
    %254 = vmatprep.subr.mxu0 0.0
    %255 = vmatpush1.msra.mxu0 %v80
    %256 = vmatprep.subr.mxu0 0.0
    %257 = vmatpush1.msra.mxu0 %v81
    %258 = vmatprep.subr.mxu0 0.0
    %259 = vmatpush1.msra.mxu0 %v82
    %260 = vmatprep.subr.mxu0 0.0
    %261 = vmatpush1.msra.mxu0 %v83
    %262 = vmatprep.subr.mxu0 0.0
    %263 = vmatpush1.msra.mxu0 %v84
    %264 = vmatprep.subr.mxu0 0.0
    %265 = vmatpush1.msra.mxu0 %v85
    %266 = vmatprep.subr.mxu0 0.0
    %267 = vmatpush1.msra.mxu0 %v86
    %268 = vmatprep.subr.mxu0 0.0
    %269 = vmatpush1.msra.mxu0 %v87
    %270 = vmatprep.subr.mxu0 0.0
    %271 = vmatpush1.msra.mxu0 %v88
    %272 = vmatprep.subr.mxu0 0.0
    %273 = vmatpush1.msra.mxu0 %v89
    %274 = vmatprep.subr.mxu0 0.0
    %275 = vmatpush1.msra.mxu0 %v90
    %276 = vmatprep.subr.mxu0 0.0
    %277 = vmatpush1.msra.mxu0 %v91
    %278 = vmatprep.subr.mxu0 0.0
    %279 = vmatpush1.msra.mxu0 %v92
    %280 = vmatprep.subr.mxu0 0.0
    %281 = vmatpush1.msra.mxu0 %v93
    %282 = vmatprep.subr.mxu0 0.0
    %283 = vmatpush1.msra.mxu0 %v94
    %284 = vmatprep.mubr.f32.mxu0 %v27
    %285 = vmatmul.mubr.f32.gmra.mrb[0].mxu0 %v26
    %v286 = vpop.f32.mrb[0].mxu0
    %v287 = vadd.f32 %v217, %v286
    %v288 = vpop.f32.mrb[0].mxu0
    %289 = vdwg.mxu0
    %290 = vmatprep.subr.mxu0 0.0
    %291 = vmatpush1.msra.mxu0 %v95
    %292 = vmatprep.subr.mxu0 0.0
    %293 = vmatpush1.msra.mxu0 %v96
    %294 = vmatprep.subr.mxu0 0.0
    %295 = vmatpush1.msra.mxu0 %v97
    %296 = vmatprep.subr.mxu0 0.0
    %297 = vmatpush1.msra.mxu0 %v98
    %298 = vmatprep.subr.mxu0 0.0
    %299 = vmatpush1.msra.mxu0 %v99
    %300 = vmatprep.subr.mxu0 0.0
    %301 = vmatpush1.msra.mxu0 %v100
    %302 = vmatprep.subr.mxu0 0.0
    %303 = vmatpush1.msra.mxu0 %v101
    %304 = vmatprep.subr.mxu0 0.0
    %305 = vmatpush1.msra.mxu0 %v102
    %306 = vmatprep.subr.mxu0 0.0
    %307 = vmatpush1.msra.mxu0 %v103
    %308 = vmatprep.subr.mxu0 0.0
    %309 = vmatpush1.msra.mxu0 %v104
    %310 = vmatprep.subr.mxu0 0.0
    %311 = vmatpush1.msra.mxu0 %v105
    %312 = vmatprep.subr.mxu0 0.0
    %313 = vmatpush1.msra.mxu0 %v106
    %314 = vmatprep.subr.mxu0 0.0
    %315 = vmatpush1.msra.mxu0 %v107
    %316 = vmatprep.subr.mxu0 0.0
    %317 = vmatpush1.msra.mxu0 %v108
    %318 = vmatprep.subr.mxu0 0.0
    %319 = vmatpush1.msra.mxu0 %v109
    %320 = vmatprep.subr.mxu0 0.0
    %321 = vmatpush1.msra.mxu0 %v110
    %322 = vmatprep.subr.mxu0 0.0
    %323 = vmatpush1.msra.mxu0 %v111
    %324 = vmatprep.subr.mxu0 0.0
    %325 = vmatpush1.msra.mxu0 %v112
    %326 = vmatprep.subr.mxu0 0.0
    %327 = vmatpush1.msra.mxu0 %v113
    %328 = vmatprep.subr.mxu0 0.0
    %329 = vmatpush1.msra.mxu0 %v114
    %330 = vmatprep.subr.mxu0 0.0
    %331 = vmatpush1.msra.mxu0 %v115
    %332 = vmatprep.subr.mxu0 0.0
    %333 = vmatpush1.msra.mxu0 %v116
    %334 = vmatprep.subr.mxu0 0.0
    %335 = vmatpush1.msra.mxu0 %v117
    %336 = vmatprep.subr.mxu0 0.0
    %337 = vmatpush1.msra.mxu0 %v118
    %338 = vmatprep.subr.mxu0 0.0
    %339 = vmatpush1.msra.mxu0 %v119
    %340 = vmatprep.subr.mxu0 0.0
    %341 = vmatpush1.msra.mxu0 %v120
    %342 = vmatprep.subr.mxu0 0.0
    %343 = vmatpush1.msra.mxu0 %v121
    %344 = vmatprep.subr.mxu0 0.0
    %345 = vmatpush1.msra.mxu0 %v122
    %346 = vmatprep.subr.mxu0 0.0
    %347 = vmatpush1.msra.mxu0 %v123
    %348 = vmatprep.subr.mxu0 0.0
    %349 = vmatpush1.msra.mxu0 %v124
    %350 = vmatprep.subr.mxu0 0.0
    %351 = vmatpush1.msra.mxu0 %v125
    %352 = vmatprep.subr.mxu0 0.0
    %353 = vmatpush1.msra.mxu0 %v126
    %354 = vmatprep.mubr.f32.mxu0 %v29
    %355 = vmatmul.mubr.f32.gmra.mrb[0].mxu0 %v28
    %v356 = vpop.f32.mrb[0].mxu0
    %v357 = vadd.f32 %v287, %v356
    %v358 = vpop.f32.mrb[0].mxu0
    %359 = vdwg.mxu0
    %360 = vmatprep.subr.mxu0 0.0
    %361 = vmatpush1.msra.mxu0 %v127
    %362 = vmatprep.subr.mxu0 0.0
    %363 = vmatpush1.msra.mxu0 %v128
    %364 = vmatprep.subr.mxu0 0.0
    %365 = vmatpush1.msra.mxu0 %v129
    %366 = vmatprep.subr.mxu0 0.0
    %367 = vmatpush1.msra.mxu0 %v130
    %368 = vmatprep.subr.mxu0 0.0
    %369 = vmatpush1.msra.mxu0 %v131
    %370 = vmatprep.subr.mxu0 0.0
    %371 = vmatpush1.msra.mxu0 %v132
    %372 = vmatprep.subr.mxu0 0.0
    %373 = vmatpush1.msra.mxu0 %v133
    %374 = vmatprep.subr.mxu0 0.0
    %375 = vmatpush1.msra.mxu0 %v134
    %376 = vmatprep.subr.mxu0 0.0
    %377 = vmatpush1.msra.mxu0 %v135
    %378 = vmatprep.subr.mxu0 0.0
    %379 = vmatpush1.msra.mxu0 %v136
    %380 = vmatprep.subr.mxu0 0.0
    %381 = vmatpush1.msra.mxu0 %v137
    %382 = vmatprep.subr.mxu0 0.0
    %383 = vmatpush1.msra.mxu0 %v138
    %384 = vmatprep.subr.mxu0 0.0
    %385 = vmatpush1.msra.mxu0 %v139
    %386 = vmatprep.subr.mxu0 0.0
    %387 = vmatpush1.msra.mxu0 %v140
    %388 = vmatprep.subr.mxu0 0.0
    %389 = vmatpush1.msra.mxu0 %v141
    %390 = vmatprep.subr.mxu0 0.0
    %391 = vmatpush1.msra.mxu0 %v142
    %392 = vmatprep.subr.mxu0 0.0
    %393 = vmatpush1.msra.mxu0 0.0
    %394 = vmatprep.subr.mxu0 0.0
    %395 = vmatpush1.msra.mxu0 0.0
    %396 = vmatprep.subr.mxu0 0.0
    %397 = vmatpush1.msra.mxu0 0.0
    %398 = vmatprep.subr.mxu0 0.0
    %399 = vmatpush1.msra.mxu0 0.0
    %400 = vmatprep.subr.mxu0 0.0
    %401 = vmatpush1.msra.mxu0 0.0
    %402 = vmatprep.subr.mxu0 0.0
    %403 = vmatpush1.msra.mxu0 0.0
    %404 = vmatprep.subr.mxu0 0.0
    %405 = vmatpush1.msra.mxu0 0.0
    %406 = vmatprep.subr.mxu0 0.0
    %407 = vmatpush1.msra.mxu0 0.0
    %408 = vmatprep.subr.mxu0 0.0
    %409 = vmatpush1.msra.mxu0 0.0
    %410 = vmatprep.subr.mxu0 0.0
    %411 = vmatpush1.msra.mxu0 0.0
    %412 = vmatprep.subr.mxu0 0.0
    %413 = vmatpush1.msra.mxu0 0.0
    %414 = vmatprep.subr.mxu0 0.0
    %415 = vmatpush1.msra.mxu0 0.0
    %416 = vmatprep.subr.mxu0 0.0
    %417 = vmatpush1.msra.mxu0 0.0
    %418 = vmatprep.subr.mxu0 0.0
    %419 = vmatpush1.msra.mxu0 0.0
    %420 = vmatprep.subr.mxu0 0.0
    %421 = vmatpush1.msra.mxu0 0.0
    %422 = vmatprep.subr.mxu0 0.0
    %423 = vmatpush1.msra.mxu0 0.0
    %424 = vmatprep.mubr.f32.mxu0 0.0
    %425 = vmatmul.mubr.f32.gmra.mrb[0].mxu0 %v30
    %v426 = vpop.f32.mrb[0].mxu0
    %v427 = vadd.f32 %v357, %v426
    %v428 = vpop.f32.mrb[0].mxu0
    %429 = vdwg.mxu0
    %v430 = vmax.f32 %v427, 0.0
    %v431 = vmul.f32 %v430, %v430
    %vm432 = vcmask 130048
    %v433 = vsel %vm432, %v431, 0.0
    %434 = vadd.xlane.f32.xlu0 %v433
    %v435 = vpop.xlane.xlu0 %434
    %v436 = vadd.f32 %v435, 1e-12
    %v437 = vrsqrt.pop %v436
    %v438 = vmul.f32 %v430, %v437
    %v439 = vld [vmem:[%s3] sm:$0xff]
    %v440 = vld [vmem:[%s3 + $0x8] sm:$0xff]
    %v442 = vsel %vm432, %v438, 0
    %444 = vmatprep.subr.mxu0 0.0
    %445 = vmatpush1.msra.mxu0 %v439
    %446 = vmatprep.subr.mxu0 0.0
    %447 = vmatpush1.msra.mxu0 %v440
    %448 = vmatprep.subr.mxu0 0.0
    %449 = vmatpush1.msra.mxu0 0.0
    %450 = vmatprep.subr.mxu0 0.0
    %451 = vmatpush1.msra.mxu0 0.0
    %452 = vmatprep.subr.mxu0 0.0
    %453 = vmatpush1.msra.mxu0 0.0
    %454 = vmatprep.subr.mxu0 0.0
    %455 = vmatpush1.msra.mxu0 0.0
    %456 = vmatprep.subr.mxu0 0.0
    %457 = vmatpush1.msra.mxu0 0.0
    %458 = vmatprep.subr.mxu0 0.0
    %459 = vmatpush1.msra.mxu0 0.0
    %460 = vmatprep.subr.mxu0 0.0
    %461 = vmatpush1.msra.mxu0 0.0
    %462 = vmatprep.subr.mxu0 0.0
    %463 = vmatpush1.msra.mxu0 0.0
    %464 = vmatprep.subr.mxu0 0.0
    %465 = vmatpush1.msra.mxu0 0.0
    %466 = vmatprep.subr.mxu0 0.0
    %467 = vmatpush1.msra.mxu0 0.0
    %468 = vmatprep.subr.mxu0 0.0
    %469 = vmatpush1.msra.mxu0 0.0
    %470 = vmatprep.subr.mxu0 0.0
    %471 = vmatpush1.msra.mxu0 0.0
    %472 = vmatprep.subr.mxu0 0.0
    %473 = vmatpush1.msra.mxu0 0.0
    %474 = vmatprep.subr.mxu0 0.0
    %475 = vmatpush1.msra.mxu0 0.0
    %476 = vmatprep.subr.mxu0 0.0
    %477 = vmatpush1.msra.mxu0 0.0
    %478 = vmatprep.subr.mxu0 0.0
    %479 = vmatpush1.msra.mxu0 0.0
    %480 = vmatprep.subr.mxu0 0.0
    %481 = vmatpush1.msra.mxu0 0.0
    %482 = vmatprep.subr.mxu0 0.0
    %483 = vmatpush1.msra.mxu0 0.0
    %484 = vmatprep.subr.mxu0 0.0
    %485 = vmatpush1.msra.mxu0 0.0
    %486 = vmatprep.subr.mxu0 0.0
    %487 = vmatpush1.msra.mxu0 0.0
    %488 = vmatprep.subr.mxu0 0.0
    %489 = vmatpush1.msra.mxu0 0.0
    %490 = vmatprep.subr.mxu0 0.0
    %491 = vmatpush1.msra.mxu0 0.0
    %492 = vmatprep.subr.mxu0 0.0
    %493 = vmatpush1.msra.mxu0 0.0
    %494 = vmatprep.subr.mxu0 0.0
    %495 = vmatpush1.msra.mxu0 0.0
    %496 = vmatprep.subr.mxu0 0.0
    %497 = vmatpush1.msra.mxu0 0.0
    %498 = vmatprep.subr.mxu0 0.0
    %499 = vmatpush1.msra.mxu0 0.0
    %500 = vmatprep.subr.mxu0 0.0
    %501 = vmatpush1.msra.mxu0 0.0
    %502 = vmatprep.subr.mxu0 0.0
    %503 = vmatpush1.msra.mxu0 0.0
    %504 = vmatprep.subr.mxu0 0.0
    %505 = vmatpush1.msra.mxu0 0.0
    %506 = vmatprep.subr.mxu0 0.0
    %507 = vmatpush1.msra.mxu0 0.0
    %508 = vmatprep.mubr.f32.mxu0 0.0
    %509 = vmatmul.mubr.f32.gmra.mrb[0].mxu0 %v442
    %v510 = vpop.f32.mrb[0].mxu0
    %v511 = vadd.f32 0.0, %v510
    %v512 = vpop.f32.mrb[0].mxu0
    %513 = vdwg.mxu0
    %v514 = vmul.f32 %v511, %v511
    %v515 = vld [vmem:[%s4] sm:$0xff]
    %v516 = vld [vmem:[%s4 + $0x8] sm:$0xff]
    %v517 = vld [vmem:[%s5] sm:$0x1]
    %v519 = vlaneseq
    %v520 = vshrl.u32 %v519, 7
    %v521 = vsub.s32 0, %v520
    %v522 = vrot.slane %v517, %v521
    %v525 = vsel %vm432, %v514, 0
    %527 = vmatprep.subr.mxu0 0.0
    %528 = vmatpush1.msra.mxu0 %v515
    %529 = vmatprep.subr.mxu0 0.0
    %530 = vmatpush1.msra.mxu0 %v516
    %531 = vmatprep.subr.mxu0 0.0
    %532 = vmatpush1.msra.mxu0 0.0
    %533 = vmatprep.subr.mxu0 0.0
    %534 = vmatpush1.msra.mxu0 0.0
    %535 = vmatprep.subr.mxu0 0.0
    %536 = vmatpush1.msra.mxu0 0.0
    %537 = vmatprep.subr.mxu0 0.0
    %538 = vmatpush1.msra.mxu0 0.0
    %539 = vmatprep.subr.mxu0 0.0
    %540 = vmatpush1.msra.mxu0 0.0
    %541 = vmatprep.subr.mxu0 0.0
    %542 = vmatpush1.msra.mxu0 0.0
    %543 = vmatprep.subr.mxu0 0.0
    %544 = vmatpush1.msra.mxu0 0.0
    %545 = vmatprep.subr.mxu0 0.0
    %546 = vmatpush1.msra.mxu0 0.0
    %547 = vmatprep.subr.mxu0 0.0
    %548 = vmatpush1.msra.mxu0 0.0
    %549 = vmatprep.subr.mxu0 0.0
    %550 = vmatpush1.msra.mxu0 0.0
    %551 = vmatprep.subr.mxu0 0.0
    %552 = vmatpush1.msra.mxu0 0.0
    %553 = vmatprep.subr.mxu0 0.0
    %554 = vmatpush1.msra.mxu0 0.0
    %555 = vmatprep.subr.mxu0 0.0
    %556 = vmatpush1.msra.mxu0 0.0
    %557 = vmatprep.subr.mxu0 0.0
    %558 = vmatpush1.msra.mxu0 0.0
    %559 = vmatprep.subr.mxu0 0.0
    %560 = vmatpush1.msra.mxu0 0.0
    %561 = vmatprep.subr.mxu0 0.0
    %562 = vmatpush1.msra.mxu0 0.0
    %563 = vmatprep.subr.mxu0 0.0
    %564 = vmatpush1.msra.mxu0 0.0
    %565 = vmatprep.subr.mxu0 0.0
    %566 = vmatpush1.msra.mxu0 0.0
    %567 = vmatprep.subr.mxu0 0.0
    %568 = vmatpush1.msra.mxu0 0.0
    %569 = vmatprep.subr.mxu0 0.0
    %570 = vmatpush1.msra.mxu0 0.0
    %571 = vmatprep.subr.mxu0 0.0
    %572 = vmatpush1.msra.mxu0 0.0
    %573 = vmatprep.subr.mxu0 0.0
    %574 = vmatpush1.msra.mxu0 0.0
    %575 = vmatprep.subr.mxu0 0.0
    %576 = vmatpush1.msra.mxu0 0.0
    %577 = vmatprep.subr.mxu0 0.0
    %578 = vmatpush1.msra.mxu0 0.0
    %579 = vmatprep.subr.mxu0 0.0
    %580 = vmatpush1.msra.mxu0 0.0
    %581 = vmatprep.subr.mxu0 0.0
    %582 = vmatpush1.msra.mxu0 0.0
    %583 = vmatprep.subr.mxu0 0.0
    %584 = vmatpush1.msra.mxu0 0.0
    %585 = vmatprep.subr.mxu0 0.0
    %586 = vmatpush1.msra.mxu0 0.0
    %587 = vmatprep.subr.mxu0 0.0
    %588 = vmatpush1.msra.mxu0 0.0
    %589 = vmatprep.subr.mxu0 0.0
    %590 = vmatpush1.msra.mxu0 0.0
    %591 = vmatprep.mubr.f32.mxu0 0.0
    %592 = vmatmul.mubr.f32.gmra.mrb[0].mxu0 %v525
    %v593 = vpop.f32.mrb[0].mxu0
    %v594 = vadd.f32 %v522, %v593
    %v595 = vpop.f32.mrb[0].mxu0
    %596 = vdwg.mxu0
    %597 = vst [vmem:[#allocation2] sm:$0xff] %v594
    // Predicated region
    $region26: #{tpu_custom_call.1} parent=1 // pred_check
      _
    $region27: #{tpu_custom_call.1} parent=1 // pred_check_branch
      %599 = sbr.rel (0) target = $region29
    $region28: #{tpu_custom_call.1} parent=1 // pred_region
      %s601 = ssub.s32 128, 128
      %602 = vsyncadd [#allocation3], %s601
      %s604 = sshll.u32 [#allocation2], 4
      %s605 = int_to_ptr.vmem [resolvable:$true] %s604
      %607 = dma.vmem_to_hbm [thread:$0]  %s605, 128, %s6, [#allocation3]
    $region29: #{tpu_custom_call.1} parent=1 // pred_fallthru
      _
    // Predicated region
    $region30: #{tpu_custom_call.1} parent=1 // pred_check
      _
    $region31: #{tpu_custom_call.1} parent=1 // pred_check_branch
      %609 = sbr.rel (0) target = $region33
    $region32: #{tpu_custom_call.1} parent=1 // pred_region
      %610 = dma.done [#allocation3], 128
    $region33: #{tpu_custom_call.1} parent=1 // pred_fallthru
      _
    %611 = vsyncpa [#allocation3], 1

</llo_original>
